<compile_context>
chip_gen: v5e
topology: v5e:2x2
jax: 0.10.0
libtpu: 0.0.40
codegen_flags: <defaults>
</compile_context>

<pallas_src>
import jax
import jax.numpy as jnp
from jax.experimental import pallas as pl
from jax.experimental.pallas import tpu as pltpu


def _linear_softmax_kernel(x_ref, w_ref, o_ref):
    # x_ref: (TB, IN) ; w_ref: (IN, OUT) ; o_ref: (TB, OUT)
    logits = jnp.dot(x_ref[...], w_ref[...],
                     preferred_element_type=jnp.float32)
    # Numerically stable softmax over the feature axis (row-wise only).
    m = jnp.max(logits, axis=-1, keepdims=True)
    e = jnp.exp(logits - m)
    denom = jnp.sum(e, axis=-1, keepdims=True)
    o_ref[...] = (e / denom).astype(o_ref.dtype)


def net_forward(x, w, *, tb=1024):
    """softmax(x @ w.T, axis=-1) for x:(B, IN), w:(OUT, IN); f32 accumulation."""
    B, IN = x.shape
    OUT, IN2 = w.shape
    assert IN == IN2

    # Pre-arrange the tiny weight once as (IN, OUT) -> canonical (M,K)x(K,N)
    # matmul in the kernel, no per-step relayout of the resident weight tile.
    w_t = w.T  # (IN, OUT)

    # Batch tile: multiple of 8 sublanes, at most `tb`, and capped at
    # ceil(B/2) (rounded up to 8) so the batch grid has >=2 parallel steps
    # for moderate B (lets v7x shard across its two TensorCores).
    half = ((pl.cdiv(B, 2) + 7) // 8) * 8
    TB = max(8, min(tb, half))
    grid = pl.cdiv(B, TB)

    itemsize = jnp.dtype(x.dtype).itemsize
    out = pl.pallas_call(
        _linear_softmax_kernel,
        out_shape=jax.ShapeDtypeStruct((B, OUT), jnp.float32),
        grid=(grid,),
        in_specs=[
            # x tile marches over B; last dim = full array dim (legal, no pad).
            pl.BlockSpec((TB, IN), lambda i: (i, 0)),
            # weight stays resident across the whole grid.
            pl.BlockSpec((IN, OUT), lambda i: (0, 0)),
        ],
        out_specs=pl.BlockSpec((TB, OUT), lambda i: (i, 0)),
        compiler_params=pltpu.CompilerParams(
            dimension_semantics=("parallel",),
        ),
        cost_estimate=pl.CostEstimate(
            flops=2 * B * IN * OUT,
            bytes_accessed=B * IN * itemsize + IN * OUT * 4 + B * OUT * 4,
            transcendentals=B * OUT,
        ),
    )(x, w_t)
    return out


if __name__ == "__main__":
    key = jax.random.PRNGKey(0)
    kx, kw = jax.random.split(key)

    B, IN, OUT = 8, 300, 4

    # Input batch.
    x = jax.random.normal(kx, (B, IN), dtype=jnp.float32)

    # Deterministic Linear(300, 4, bias=False) weight, PyTorch-style
    # uniform(-1/sqrt(in_features), +1/sqrt(in_features)) init.
    bound = 1.0 / jnp.sqrt(jnp.float32(IN))
    w = jax.random.uniform(kw, (OUT, IN), dtype=jnp.float32,
                           minval=-bound, maxval=bound)

    out = net_forward(x, w)
    out = jax.block_until_ready(out)

    # Reference check against plain JAX (exact softmax now -> tight tolerance).
    ref = jax.nn.softmax(x @ w.T, axis=-1)
    assert out.shape == (B, OUT)
    assert jnp.allclose(out, ref, atol=1e-5, rtol=1e-5), "mismatch vs reference"

    print("KERNEL_OK")
</pallas_src>

<mosaic_0001>
module attributes {stable_mosaic.version = 11 : i64} {
  func.func @_linear_softmax_kernel(%arg0: i32, %arg1: memref<8x300xf32, #tpu.memory_space<vmem>>, %arg2: memref<300x4xf32, #tpu.memory_space<vmem>>, %arg3: memref<8x4xf32, #tpu.memory_space<vmem>>) attributes {dimension_semantics = [#tpu.dimension_semantics<parallel>], iteration_bounds = array<i64: 1>, scalar_prefetch = 0 : i64, scratch_operands = 0 : i64, tpu.core_type = #tpu.core_type<tc>, window_params = [{transform_indices = @transform_0, window_bounds = array<i64: 8, 300>}, {pipeline_mode = #tpu.pipeline_mode<synchronous>, transform_indices = @transform_1, window_bounds = array<i64: 300, 4>}, {transform_indices = @transform_2, window_bounds = array<i64: 8, 4>}]} {
    %c0 = arith.constant 0 : index
    %c0_0 = arith.constant 0 : index
    %0 = vector.load %arg1[%c0, %c0_0] : memref<8x300xf32, #tpu.memory_space<vmem>>, vector<8x300xf32>
    %c0_1 = arith.constant 0 : index
    %c0_2 = arith.constant 0 : index
    %1 = vector.load %arg2[%c0_1, %c0_2] : memref<300x4xf32, #tpu.memory_space<vmem>>, vector<300x4xf32>
    %cst = arith.constant dense<0.000000e+00> : vector<8x4xf32>
    %2 = tpu.matmul %0, %1, %cst {dimension_numbers = #tpu.dot_dimension_numbers<[1], [0], [0], [1], [0, 0, 1, 1], [], []>} : vector<8x300xf32>, vector<300x4xf32>, vector<8x4xf32> -> vector<8x4xf32>
    %cst_3 = arith.constant dense<0xFF800000> : vector<8xf32>
    %3 = vector.multi_reduction <maximumf>, %2, %cst_3 [1] : vector<8x4xf32> to vector<8xf32>
    %4 = vector.shape_cast %3 : vector<8xf32> to vector<8x1xf32>
    %5 = vector.broadcast %4 : vector<8x1xf32> to vector<8x4xf32>
    %6 = arith.subf %2, %5 : vector<8x4xf32>
    %7 = math.exp %6 : vector<8x4xf32>
    %cst_4 = arith.constant dense<0.000000e+00> : vector<8xf32>
    %8 = vector.multi_reduction <add>, %7, %cst_4 [1] : vector<8x4xf32> to vector<8xf32>
    %9 = vector.shape_cast %8 : vector<8xf32> to vector<8x1xf32>
    %10 = vector.broadcast %9 : vector<8x1xf32> to vector<8x4xf32>
    %11 = arith.divf %7, %10 : vector<8x4xf32>
    %c0_5 = arith.constant 0 : index
    %c0_6 = arith.constant 0 : index
    %12 = vector.load %arg3[%c0_5, %c0_6] : memref<8x4xf32, #tpu.memory_space<vmem>>, vector<8x4xf32>
    tpu.vector_store %arg3[%c0_5, %c0_6], %11 {strides = array<i32>} : memref<8x4xf32, #tpu.memory_space<vmem>>, vector<8x4xf32>,
    return
  }
  func.func @transform_0(%arg0: i32) -> (i32, i32) {
    %c0_i32 = arith.constant 0 : i32
    %c0_i32_0 = arith.constant 0 : i32
    return %arg0, %c0_i32 : i32, i32
  }
  func.func @transform_1(%arg0: i32) -> (i32, i32) {
    %c0_i32 = arith.constant 0 : i32
    %c0_i32_0 = arith.constant 0 : i32
    %c0_i32_1 = arith.constant 0 : i32
    return %c0_i32, %c0_i32_0 : i32, i32
  }
  func.func @transform_2(%arg0: i32) -> (i32, i32) {
    %c0_i32 = arith.constant 0 : i32
    %c0_i32_0 = arith.constant 0 : i32
    return %arg0, %c0_i32 : i32, i32
  }
}

</mosaic_0001>

<llo_original>
// kernel: tpu_custom_call.1
$region0: #{tpu_custom_call.1}
  #allocation0 [shape = 'u32[]', space=smem, size = 0x4, offset = 0x4, fixed_abs, tag = 'smem constant byte address 0x4 - core index']
  #allocation1 [shape = 'u32[72,128]{1,0:T(1,128)}', space=vmem, size = 0x9000, scoped, tag = 'internal scratch']
  %s0 = inlined_call_operand.vmem [shape: f32[8,300], index: 0, kind: input, shape index: {}]
  %s1 = inlined_call_operand.vmem [shape: f32[300,4], index: 1, kind: input, shape index: {}]
  %s2 = inlined_call_operand.vmem [shape: f32[8,4], index: 2, kind: output, shape index: {}]
  %s3 = sld [smem:[#allocation0]]
  $region18: #{tpu_custom_call.1} parent=0
    _
  %s5 = ssub.s32 1, %s3
  %s6 = scalar_select 0, %s5, %s3
  // Predicated region
  $region2: #{tpu_custom_call.1} parent=0 // pred_check
    _
  $region3: #{tpu_custom_call.1} parent=0 // pred_check_branch
    %8 = sbr.rel (0) target = $region5
  $region4: #{tpu_custom_call.1} parent=0 // pred_region
    _
  $region5: #{tpu_custom_call.1} parent=0 // pred_fallthru
    _
  // Predicated region
  $region6: #{tpu_custom_call.1} parent=0 // pred_check
    _
  $region7: #{tpu_custom_call.1} parent=0 // pred_check_branch
    %10 = sbr.rel (0) target = $region9
  $region8: #{tpu_custom_call.1} parent=0 // pred_region
    _
  $region9: #{tpu_custom_call.1} parent=0 // pred_fallthru
    _
  %v11 = vld [vmem:[%s0] sm:$0xff]
  %v12 = vld [vmem:[%s0 + $0x8] sm:$0xff]
  %v13 = vld [vmem:[%s0 + $0x10] sm:$0xff]
  %v14 = vld [vmem:[%s1] sm:$0xff]
  %v15 = vld [vmem:[%s1 + $0x8] sm:$0xff]
  %v16 = vld [vmem:[%s1 + $0x10] sm:$0xff]
  %v17 = vld [vmem:[%s1 + $0x18] sm:$0xff]
  %v18 = vld [vmem:[%s1 + $0x20] sm:$0xff]
  %v19 = vld [vmem:[%s1 + $0x28] sm:$0xff]
  %v20 = vld [vmem:[%s1 + $0x30] sm:$0xff]
  %v21 = vld [vmem:[%s1 + $0x38] sm:$0xff]
  %v22 = vld [vmem:[%s1 + $0x40] sm:$0xff]
  %v23 = vld [vmem:[%s1 + $0x48] sm:$0xff]
  %v24 = vld [vmem:[%s1 + $0x50] sm:$0xff]
  %v25 = vld [vmem:[%s1 + $0x58] sm:$0xff]
  %v26 = vld [vmem:[%s1 + $0x60] sm:$0xff]
  %v27 = vld [vmem:[%s1 + $0x68] sm:$0xff]
  %v28 = vld [vmem:[%s1 + $0x70] sm:$0xff]
  %v29 = vld [vmem:[%s1 + $0x78] sm:$0xff]
  %v30 = vld [vmem:[%s1 + $0x80] sm:$0xff]
  %v31 = vld [vmem:[%s1 + $0x88] sm:$0xff]
  %v32 = vld [vmem:[%s1 + $0x90] sm:$0xff]
  %v33 = vld [vmem:[%s1 + $0x98] sm:$0xff]
  %v34 = vld [vmem:[%s1 + $0xa0] sm:$0xff]
  %v35 = vld [vmem:[%s1 + $0xa8] sm:$0xff]
  %v36 = vld [vmem:[%s1 + $0xb0] sm:$0xff]
  %v37 = vld [vmem:[%s1 + $0xb8] sm:$0xff]
  %v38 = vld [vmem:[%s1 + $0xc0] sm:$0xff]
  %v39 = vld [vmem:[%s1 + $0xc8] sm:$0xff]
  %v40 = vld [vmem:[%s1 + $0xd0] sm:$0xff]
  %v41 = vld [vmem:[%s1 + $0xd8] sm:$0xff]
  %v42 = vld [vmem:[%s1 + $0xe0] sm:$0xff]
  %v43 = vld [vmem:[%s1 + $0xe8] sm:$0xff]
  %v44 = vld [vmem:[%s1 + $0xf0] sm:$0xff]
  %v45 = vld [vmem:[%s1 + $0xf8] sm:$0xff]
  %v46 = vld [vmem:[%s1 + $0x100] sm:$0xff]
  %v47 = vld [vmem:[%s1 + $0x108] sm:$0xff]
  %v48 = vld [vmem:[%s1 + $0x110] sm:$0xff]
  %v49 = vld [vmem:[%s1 + $0x118] sm:$0xff]
  %v50 = vld [vmem:[%s1 + $0x120] sm:$0xff]
  %v51 = vld [vmem:[%s1 + $0x128] sm:$0xf]
  %vm52 = vcmask 359424
  %v54 = vsel %vm52, %v13, 0
  %vm56 = vcmask 1043456
  %v58 = vsel %vm56, %v51, 0
  %60 = vmatpush.msra.mxu0 %v29
  %61 = vmatpush.msra.mxu0 %v28
  %62 = vmatpush.msra.mxu0 %v27
  %63 = vmatpush.msra.mxu0 %v26
  %64 = vmatpush.msra.mxu0 %v25
  %65 = vmatpush.msra.mxu0 %v24
  %66 = vmatpush.msra.mxu0 %v23
  %67 = vmatpush.msra.mxu0 %v22
  %68 = vmatpush.msra.mxu0 %v21
  %69 = vmatpush.msra.mxu0 %v20
  %70 = vmatpush.msra.mxu0 %v19
  %71 = vmatpush.msra.mxu0 %v18
  %72 = vmatpush.msra.mxu0 %v17
  %73 = vmatpush.msra.mxu0 %v16
  %74 = vmatpush.msra.mxu0 %v15
  %75 = vmatpush.msra.mxu0 %v14
  %76 = vmatmul.f32.gmra.mxu0 %v11
  %v77 = vpop.f32.mrf.mxu0
  %v78 = vadd.f32 0.0, %v77
  %79 = vdwg.mxu0
  %80 = vmatpush.msra.mxu0 %v45
  %81 = vmatpush.msra.mxu0 %v44
  %82 = vmatpush.msra.mxu0 %v43
  %83 = vmatpush.msra.mxu0 %v42
  %84 = vmatpush.msra.mxu0 %v41
  %85 = vmatpush.msra.mxu0 %v40
  %86 = vmatpush.msra.mxu0 %v39
  %87 = vmatpush.msra.mxu0 %v38
  %88 = vmatpush.msra.mxu0 %v37
  %89 = vmatpush.msra.mxu0 %v36
  %90 = vmatpush.msra.mxu0 %v35
  %91 = vmatpush.msra.mxu0 %v34
  %92 = vmatpush.msra.mxu0 %v33
  %93 = vmatpush.msra.mxu0 %v32
  %94 = vmatpush.msra.mxu0 %v31
  %95 = vmatpush.msra.mxu0 %v30
  %96 = vmatmul.f32.gmra.mxu0 %v12
  %v97 = vpop.f32.mrf.mxu0
  %v98 = vadd.f32 %v78, %v97
  %99 = vdwg.mxu0
  %100 = vmatpush.msra.mxu0 0.0
  %101 = vmatpush.msra.mxu0 0.0
  %102 = vmatpush.msra.mxu0 0.0
  %103 = vmatpush.msra.mxu0 0.0
  %104 = vmatpush.msra.mxu0 0.0
  %105 = vmatpush.msra.mxu0 0.0
  %106 = vmatpush.msra.mxu0 0.0
  %107 = vmatpush.msra.mxu0 0.0
  %108 = vmatpush.msra.mxu0 0.0
  %109 = vmatpush.msra.mxu0 0.0
  %110 = vmatpush.msra.mxu0 %v58
  %111 = vmatpush.msra.mxu0 %v50
  %112 = vmatpush.msra.mxu0 %v49
  %113 = vmatpush.msra.mxu0 %v48
  %114 = vmatpush.msra.mxu0 %v47
  %115 = vmatpush.msra.mxu0 %v46
  %116 = vmatmul.f32.gmra.mxu0 %v54
  %v117 = vpop.f32.mrf.mxu0
  %v118 = vadd.f32 %v98, %v117
  %119 = vdwg.mxu0
  %vm120 = vcmask 31744
  %v121 = vsel %vm120, %v118, -inf
  %122 = vmax.xlane.f32.xlu0 %v121
  %v123 = vpop.xlane.xlu0 %122
  %v124 = vsub.f32 %v118, %v123
  %v125 = vmul.f32 %v124, 1.442695
  %v126 = vpow.pop %v125
  %v127 = vsel %vm120, %v126, 0.0
  %128 = vadd.xlane.f32.xlu0 %v127
  %v129 = vpop.xlane.xlu0 %128
  %v130 = vrcp.pop %v129
  %v131 = vmul.f32 %v129, %v130
  %v132 = vsub.f32 1.0, %v131
  %v133 = vmul.f32 %v130, %v132
  %v134 = vadd.f32 %v130, %v133
  %vm135 = vweird.f32 %v129
  %vm136 = vweird.f32 %v130
  %vm137 = vmor %vm135, %vm136
  %v138 = vsel %vm137, %v130, %v134
  %v139 = vand.u32 2147483647, %v129
  %vm140 = vcmp.eq.f32.partialorder %v139, 8.507059e+37
  %v141 = vand.u32 %v129, 2147483648
  %v142 = vor.u32 1.1754944e-38, %v141
  %v143 = vsel %vm140, %v142, %v138
  %v144 = vmul.f32 %v126, %v143
  %145 = vst.msk [vmem:[%s2] sm:$0xff] %vm120, %v144
  // Predicated region
  $region10: #{tpu_custom_call.1} parent=0 // pred_check
    _
  $region11: #{tpu_custom_call.1} parent=0 // pred_check_branch
    %147 = sbr.rel (0) target = $region13
  $region12: #{tpu_custom_call.1} parent=0 // pred_region
    _
  $region13: #{tpu_custom_call.1} parent=0 // pred_fallthru
    _
  // Predicated region
  $region14: #{tpu_custom_call.1} parent=0 // pred_check
    _
  $region15: #{tpu_custom_call.1} parent=0 // pred_check_branch
    %149 = sbr.rel (0) target = $region17
  $region16: #{tpu_custom_call.1} parent=0 // pred_region
    _
  $region17: #{tpu_custom_call.1} parent=0 // pred_fallthru
    _

</llo_original>
